<compile_context>
chip_gen: v5e
topology: v5e:2x2
jax: 0.10.0
libtpu: 0.0.40
codegen_flags: <defaults>
</compile_context>

<pallas_src>
import functools

import jax
import jax.numpy as jnp
from jax.experimental import pallas as pl
from jax.experimental.pallas import tpu as pltpu

STATE_DIM = 294
ACTION_DIM = 39
HIDDEN1 = 64
HIDDEN2 = 256

H1_PAD = 128              # fc1 output dim 64 -> 128 (zero columns, exact)
BRANCH = 2 * HIDDEN2      # fused fc_value || fc_adv -> 512
HEAD_PAD = 128            # fused [adv (39) | zeros | value (1)] -> 128 lanes
VALUE_COL = HEAD_PAD - 1  # value head sits in the last lane


def _cdiv(a, b):
    return -(-a // b)


def _round_up(a, m):
    return _cdiv(a, m) * m


def _ddqn_kernel(x_ref, w1_ref, b1_ref, wbr_ref, bbr_ref, whd_ref, bhd_ref,
                 q_ref):
    # fc1 + relu.  The f32 state block is cast to bf16 in VMEM (no host pass);
    # the K = 294 contraction is handled directly by the MXU lowering.
    x = x_ref[...].astype(jnp.bfloat16)                        # (T, 294)
    y = jnp.dot(x, w1_ref[...], preferred_element_type=jnp.float32)
    y = jnp.maximum(y + b1_ref[...], 0.0)                      # (T, 128) f32

    # fused fc_value || fc_adv; bias + relu in bf16 (largest intermediate,
    # immediately consumed by a bf16 matmul).
    h = jnp.dot(y.astype(jnp.bfloat16), wbr_ref[...],
                preferred_element_type=jnp.float32)
    h = jnp.maximum(h.astype(jnp.bfloat16) + bbr_ref[...], 0.0)   # (T,512) bf16

    # fused heads: lanes 0..38 = adv, lanes 39..126 = exact 0, lane 127 = value
    head = jnp.dot(h, whd_ref[...], preferred_element_type=jnp.float32)
    head = head + bhd_ref[...]                                 # (T, 128) f32

    value = head[:, VALUE_COL:VALUE_COL + 1]                   # (T, 1)
    # padding lanes are exactly zero, so sum(head) - value == sum over 39 advs
    adv_sum = jnp.sum(head, axis=1, keepdims=True) - value
    adv_mean = adv_sum * (1.0 / ACTION_DIM)                    # mul, not divide

    # NOTE: only lanes 0..38 are Q-values.  Lane 127 holds value+value-mean and
    # lanes 39..126 hold value-mean; callers MUST slice [:, :ACTION_DIM].
    q_ref[...] = (value + head - adv_mean).astype(q_ref.dtype)


@functools.partial(jax.jit, static_argnames=("max_tile",))
def ddqn_forward(state, packed_params, max_tile=512):
    """state: (B, STATE_DIM) float32.  Returns Q: (B, ACTION_DIM) float32."""
    B = state.shape[0]
    w1p, b1p, wbr, bbr, whd, bhd = packed_params

    # Minimal row pad only (multiple of 8 sublanes).  No lane pad / dtype cast
    # pass on the host -- the kernel streams the f32 state directly from HBM.
    Bp = _round_up(max(B, 8), 8)
    x = state if Bp == B else jnp.pad(state, ((0, Bp - B), (0, 0)))

    # Grid/tile selection: a single block on single-TC chips (v5e/v6e); split
    # real rows across two parallel blocks on v7x (2 TCs) once B is large
    # enough that the split pays for the extra grid step.
    try:
        two_tc = "7" in jax.devices()[0].device_kind   # "TPU7x"
    except Exception:  # pragma: no cover - conservative fallback
        two_tc = False
    min_blocks = 2 if (two_tc and Bp >= 64) else 1
    tile = min(max_tile, _round_up(_cdiv(Bp, min_blocks), 8))
    grid = (_cdiv(Bp, tile),)

    # Weights use full-array blocks with constant index_maps: the pipeline sees
    # an unchanged block index across grid steps and keeps them VMEM-resident.
    def full(a):
        return pl.BlockSpec(a.shape, lambda i: (0, 0))

    q = pl.pallas_call(
        _ddqn_kernel,
        out_shape=jax.ShapeDtypeStruct((Bp, HEAD_PAD), jnp.float32),
        grid_spec=pltpu.PrefetchScalarGridSpec(
            num_scalar_prefetch=0,
            grid=grid,
            in_specs=[
                pl.BlockSpec((tile, STATE_DIM), lambda i: (i, 0)),   # x (f32)
                full(w1p), full(b1p),
                full(wbr), full(bbr),
                full(whd), full(bhd),
            ],
            out_specs=pl.BlockSpec((tile, HEAD_PAD), lambda i: (i, 0)),
        ),
        compiler_params=pltpu.CompilerParams(
            dimension_semantics=("parallel",)),
    )(x, w1p, b1p, wbr, bbr, whd, bhd)

    return q[:B, :ACTION_DIM]


def init_params(key):
    """Deterministic synthetic parameters (PyTorch-style uniform fan-in init).
    Weights stored as (in, out); biases as (1, out)."""
    def linear(key, fan_in, fan_out):
        kw, kb = jax.random.split(key)
        bound = 1.0 / jnp.sqrt(fan_in)
        w = jax.random.uniform(kw, (fan_in, fan_out), jnp.float32, -bound, bound)
        b = jax.random.uniform(kb, (1, fan_out), jnp.float32, -bound, bound)
        return w, b

    k1, k2, k3, k4, k5 = jax.random.split(key, 5)
    w1, b1 = linear(k1, STATE_DIM, HIDDEN1)
    wv, bv = linear(k2, HIDDEN1, HIDDEN2)
    wa, ba = linear(k3, HIDDEN1, HIDDEN2)
    wval, bval = linear(k4, HIDDEN2, 1)
    wadv, badv = linear(k5, HIDDEN2, ACTION_DIM)
    return (w1, b1, wv, bv, wa, ba, wval, bval, wadv, badv)


def pack_params(params, compute_dtype=jnp.bfloat16):
    """One-time fusion + padding of the PyTorch-layout parameters.

    * w1 keeps K = 294; only its 64 output cols are zero-padded to 128 (exact).
    * fc_value / fc_adv concatenated along the output dim -> (128, 512).
    * value / adv heads merged into one (512, 128) matrix:
        rows   0..255 (value branch) feed only lane VALUE_COL (=127),
        rows 256..511 (adv branch)   feed only lanes 0..38,
        all other entries are exactly zero.
    Matmul operands (and the branch bias, which is added in bf16) are bf16;
    b1 / head bias stay f32.
    """
    (w1, b1, wv, bv, wa, ba, wval, bval, wadv, badv) = params

    w1p = jnp.pad(w1, ((0, 0), (0, H1_PAD - HIDDEN1))).astype(compute_dtype)
    b1p = jnp.pad(b1, ((0, 0), (0, H1_PAD - HIDDEN1)))            # (1,128) f32

    wbr = jnp.pad(jnp.concatenate([wv, wa], axis=1),
                  ((0, H1_PAD - HIDDEN1), (0, 0))).astype(compute_dtype)
    bbr = jnp.concatenate([bv, ba], axis=1).astype(compute_dtype)  # (1,512) bf16

    whd = jnp.zeros((BRANCH, HEAD_PAD), jnp.float32)
    whd = whd.at[:HIDDEN2, VALUE_COL:VALUE_COL + 1].set(wval)
    whd = whd.at[HIDDEN2:, :ACTION_DIM].set(wadv)
    whd = whd.astype(compute_dtype)

    bhd = jnp.zeros((1, HEAD_PAD), jnp.float32)
    bhd = bhd.at[:, VALUE_COL:VALUE_COL + 1].set(bval)
    bhd = bhd.at[:, :ACTION_DIM].set(badv)

    return (w1p, b1p, wbr, bbr, whd, bhd)


def ddqn_forward_ref(state, params):
    """Pure-JAX f32 reference for correctness checking."""
    (w1, b1, wv, bv, wa, ba, wval, bval, wadv, badv) = params
    y = jnp.maximum(state @ w1 + b1, 0.0)
    v = jnp.maximum(y @ wv + bv, 0.0) @ wval + bval
    a = jnp.maximum(y @ wa + ba, 0.0) @ wadv + badv
    return v + a - jnp.mean(a, axis=1, keepdims=True)


# TODO(synk): select_action / get_best_next_actions / get_best_seq_actions are
# host-side numpy control loops around forward() and are not part of the
# module's forward pass, so they are not implemented as kernels.

if __name__ == "__main__":
    key = jax.random.PRNGKey(0)
    kp, kx = jax.random.split(key)
    params = init_params(kp)
    packed = pack_params(params)

    B = 2
    state = jax.random.normal(kx, (B, STATE_DIM), jnp.float32)

    q = ddqn_forward(state, packed)
    q = jax.block_until_ready(q)

    q_ref = ddqn_forward_ref(state, params)
    assert q.shape == (B, ACTION_DIM)
    # bf16 MXU inputs (and bf16 bias+relu on the branch layer) -> slightly
    # looser tolerance than the f32 reference; argmax agreement is what DQN
    # actually needs and holds for non-near-tied Q values.
    assert jnp.allclose(q, q_ref, atol=5e-2, rtol=5e-2), "mismatch vs reference"

    print("KERNEL_OK")
</pallas_src>

<mosaic_0001>
module attributes {stable_mosaic.version = 11 : i64} {
  func.func @_ddqn_kernel(%arg0: i32, %arg1: memref<8x294xf32, #tpu.memory_space<vmem>>, %arg2: memref<294x128xbf16, #tpu.memory_space<vmem>>, %arg3: memref<1x128xf32, #tpu.memory_space<vmem>>, %arg4: memref<128x512xbf16, #tpu.memory_space<vmem>>, %arg5: memref<1x512xbf16, #tpu.memory_space<vmem>>, %arg6: memref<512x128xbf16, #tpu.memory_space<vmem>>, %arg7: memref<1x128xf32, #tpu.memory_space<vmem>>, %arg8: memref<8x128xf32, #tpu.memory_space<vmem>>) attributes {dimension_semantics = [#tpu.dimension_semantics<parallel>], iteration_bounds = array<i64: 1>, scalar_prefetch = 0 : i64, scratch_operands = 0 : i64, tpu.core_type = #tpu.core_type<tc>, window_params = [{transform_indices = @transform_0, window_bounds = array<i64: 8, 294>}, {pipeline_mode = #tpu.pipeline_mode<synchronous>, transform_indices = @transform_1, window_bounds = array<i64: 294, 128>}, {pipeline_mode = #tpu.pipeline_mode<synchronous>, transform_indices = @transform_2, window_bounds = array<i64: 1, 128>}, {pipeline_mode = #tpu.pipeline_mode<synchronous>, transform_indices = @transform_3, window_bounds = array<i64: 128, 512>}, {pipeline_mode = #tpu.pipeline_mode<synchronous>, transform_indices = @transform_4, window_bounds = array<i64: 1, 512>}, {pipeline_mode = #tpu.pipeline_mode<synchronous>, transform_indices = @transform_5, window_bounds = array<i64: 512, 128>}, {pipeline_mode = #tpu.pipeline_mode<synchronous>, transform_indices = @transform_6, window_bounds = array<i64: 1, 128>}, {transform_indices = @transform_7, window_bounds = array<i64: 8, 128>}]} {
    %c0 = arith.constant 0 : index
    %c0_0 = arith.constant 0 : index
    %0 = vector.load %arg1[%c0, %c0_0] : memref<8x294xf32, #tpu.memory_space<vmem>>, vector<8x294xf32>
    %1 = arith.truncf %0 : vector<8x294xf32> to vector<8x294xbf16>
    %c0_1 = arith.constant 0 : index
    %c0_2 = arith.constant 0 : index
    %2 = vector.load %arg2[%c0_1, %c0_2] : memref<294x128xbf16, #tpu.memory_space<vmem>>, vector<294x128xbf16>
    %cst = arith.constant dense<0.000000e+00> : vector<8x128xf32>
    %3 = tpu.matmul %1, %2, %cst {dimension_numbers = #tpu.dot_dimension_numbers<[1], [0], [0], [1], [0, 0, 1, 1], [], []>} : vector<8x294xbf16>, vector<294x128xbf16>, vector<8x128xf32> -> vector<8x128xf32>
    %c0_3 = arith.constant 0 : index
    %c0_4 = arith.constant 0 : index
    %4 = vector.load %arg3[%c0_3, %c0_4] : memref<1x128xf32, #tpu.memory_space<vmem>>, vector<1x128xf32>
    %5 = vector.broadcast %4 : vector<1x128xf32> to vector<8x128xf32>
    %6 = arith.addf %3, %5 : vector<8x128xf32>
    %cst_5 = arith.constant 0.000000e+00 : f32
    %7 = vector.broadcast %cst_5 : f32 to vector<8x128xf32>
    %8 = arith.maximumf %6, %7 : vector<8x128xf32>
    %9 = arith.truncf %8 : vector<8x128xf32> to vector<8x128xbf16>
    %c0_6 = arith.constant 0 : index
    %c0_7 = arith.constant 0 : index
    %10 = vector.load %arg4[%c0_6, %c0_7] : memref<128x512xbf16, #tpu.memory_space<vmem>>, vector<128x512xbf16>
    %cst_8 = arith.constant dense<0.000000e+00> : vector<8x512xf32>
    %11 = tpu.matmul %9, %10, %cst_8 {dimension_numbers = #tpu.dot_dimension_numbers<[1], [0], [0], [1], [0, 0, 1, 1], [], []>} : vector<8x128xbf16>, vector<128x512xbf16>, vector<8x512xf32> -> vector<8x512xf32>
    %12 = arith.truncf %11 : vector<8x512xf32> to vector<8x512xbf16>
    %c0_9 = arith.constant 0 : index
    %c0_10 = arith.constant 0 : index
    %13 = vector.load %arg5[%c0_9, %c0_10] : memref<1x512xbf16, #tpu.memory_space<vmem>>, vector<1x512xbf16>
    %14 = vector.broadcast %13 : vector<1x512xbf16> to vector<8x512xbf16>
    %15 = arith.addf %12, %14 : vector<8x512xbf16>
    %cst_11 = arith.constant 0.000000e+00 : bf16
    %16 = vector.broadcast %cst_11 : bf16 to vector<8x512xbf16>
    %17 = arith.maximumf %15, %16 : vector<8x512xbf16>
    %c0_12 = arith.constant 0 : index
    %c0_13 = arith.constant 0 : index
    %18 = vector.load %arg6[%c0_12, %c0_13] : memref<512x128xbf16, #tpu.memory_space<vmem>>, vector<512x128xbf16>
    %cst_14 = arith.constant dense<0.000000e+00> : vector<8x128xf32>
    %19 = tpu.matmul %17, %18, %cst_14 {dimension_numbers = #tpu.dot_dimension_numbers<[1], [0], [0], [1], [0, 0, 1, 1], [], []>} : vector<8x512xbf16>, vector<512x128xbf16>, vector<8x128xf32> -> vector<8x128xf32>
    %c0_15 = arith.constant 0 : index
    %c0_16 = arith.constant 0 : index
    %20 = vector.load %arg7[%c0_15, %c0_16] : memref<1x128xf32, #tpu.memory_space<vmem>>, vector<1x128xf32>
    %21 = vector.broadcast %20 : vector<1x128xf32> to vector<8x128xf32>
    %22 = arith.addf %19, %21 : vector<8x128xf32>
    %23 = vector.extract_strided_slice %22 {offsets = [0, 127], sizes = [8, 1], strides = [1, 1]} : vector<8x128xf32> to vector<8x1xf32>
    %cst_17 = arith.constant dense<0.000000e+00> : vector<8xf32>
    %24 = vector.multi_reduction <add>, %22, %cst_17 [1] : vector<8x128xf32> to vector<8xf32>
    %25 = vector.shape_cast %24 : vector<8xf32> to vector<8x1xf32>
    %26 = arith.subf %25, %23 : vector<8x1xf32>
    %cst_18 = arith.constant 0.025641026 : f32
    %27 = vector.broadcast %cst_18 : f32 to vector<8x1xf32>
    %28 = arith.mulf %26, %27 : vector<8x1xf32>
    %29 = vector.broadcast %23 : vector<8x1xf32> to vector<8x128xf32>
    %30 = arith.addf %29, %22 : vector<8x128xf32>
    %31 = vector.broadcast %28 : vector<8x1xf32> to vector<8x128xf32>
    %32 = arith.subf %30, %31 : vector<8x128xf32>
    %c0_19 = arith.constant 0 : index
    %c0_20 = arith.constant 0 : index
    %33 = vector.load %arg8[%c0_19, %c0_20] : memref<8x128xf32, #tpu.memory_space<vmem>>, vector<8x128xf32>
    tpu.vector_store %arg8[%c0_19, %c0_20], %32 {strides = array<i32>} : memref<8x128xf32, #tpu.memory_space<vmem>>, vector<8x128xf32>,
    return
  }
  func.func @transform_0(%arg0: i32) -> (i32, i32) {
    %c0_i32 = arith.constant 0 : i32
    %c0_i32_0 = arith.constant 0 : i32
    return %arg0, %c0_i32 : i32, i32
  }
  func.func @transform_1(%arg0: i32) -> (i32, i32) {
    %c0_i32 = arith.constant 0 : i32
    %c0_i32_0 = arith.constant 0 : i32
    %c0_i32_1 = arith.constant 0 : i32
    return %c0_i32, %c0_i32_0 : i32, i32
  }
  func.func @transform_2(%arg0: i32) -> (i32, i32) {
    %c0_i32 = arith.constant 0 : i32
    %c0_i32_0 = arith.constant 0 : i32
    %c0_i32_1 = arith.constant 0 : i32
    return %c0_i32, %c0_i32_0 : i32, i32
  }
  func.func @transform_3(%arg0: i32) -> (i32, i32) {
    %c0_i32 = arith.constant 0 : i32
    %c0_i32_0 = arith.constant 0 : i32
    %c0_i32_1 = arith.constant 0 : i32
    return %c0_i32, %c0_i32_0 : i32, i32
  }
  func.func @transform_4(%arg0: i32) -> (i32, i32) {
    %c0_i32 = arith.constant 0 : i32
    %c0_i32_0 = arith.constant 0 : i32
    %c0_i32_1 = arith.constant 0 : i32
    return %c0_i32, %c0_i32_0 : i32, i32
  }
  func.func @transform_5(%arg0: i32) -> (i32, i32) {
    %c0_i32 = arith.constant 0 : i32
    %c0_i32_0 = arith.constant 0 : i32
    %c0_i32_1 = arith.constant 0 : i32
    return %c0_i32, %c0_i32_0 : i32, i32
  }
  func.func @transform_6(%arg0: i32) -> (i32, i32) {
    %c0_i32 = arith.constant 0 : i32
    %c0_i32_0 = arith.constant 0 : i32
    %c0_i32_1 = arith.constant 0 : i32
    return %c0_i32, %c0_i32_0 : i32, i32
  }
  func.func @transform_7(%arg0: i32) -> (i32, i32) {
    %c0_i32 = arith.constant 0 : i32
    %c0_i32_0 = arith.constant 0 : i32
    return %arg0, %c0_i32 : i32, i32
  }
}

</mosaic_0001>

<llo_original>
// kernel: ddqn_forward.1
$region0: #{ddqn_forward.1}
  #allocation0 [shape = 'u32[]', space=smem, size = 0x4, offset = 0x4, fixed_abs, tag = 'smem constant byte address 0x4 - core index']
  #allocation1 [shape = 'u32[72,128]{1,0:T(1,128)}', space=vmem, size = 0x9000, scoped, tag = 'internal scratch']
  %s0 = inlined_call_operand.vmem [shape: f32[8,294], index: 0, kind: input, shape index: {}]
  %s1 = inlined_call_operand.hbm [shape: bf16[294,128], index: 1, kind: input, shape index: {}]
  %s2 = inlined_call_operand.vmem [shape: f32[1,128], index: 2, kind: input, shape index: {}]
  %s3 = inlined_call_operand.hbm [shape: bf16[128,512], index: 3, kind: input, shape index: {}]
  %s4 = inlined_call_operand.vmem [shape: bf16[1,512], index: 4, kind: input, shape index: {}]
  %s5 = inlined_call_operand.hbm [shape: bf16[512,128], index: 5, kind: input, shape index: {}]
  %s6 = inlined_call_operand.vmem [shape: f32[1,128], index: 6, kind: input, shape index: {}]
  %s7 = inlined_call_operand.vmem [shape: f32[8,128], index: 7, kind: output, shape index: {}]
  %s8 = sld [smem:[#allocation0]]
  $region50: #{ddqn_forward.1} parent=0
    _
  %s10 = ssub.s32 1, %s8
  %s11 = scalar_select 0, %s10, %s8
  $region1: #{ddqn_forward.1} parent=0
    #allocation2 [shape = 'u8[75776]{0}', space=vmem, size = 0x12800, scoped, tag = 'input window, operand 1, single buffered']
    #allocation3 [shape = 's32[1]{0}', space=sflag, size = 0x4, scoped, tag = 'scoped memory for ddqn_forward.1']
    #allocation4 [shape = 'u8[131072]{0}', space=vmem, size = 0x20000, scoped, tag = 'input window, operand 3, single buffered']
    #allocation5 [shape = 's32[1]{0}', space=sflag, size = 0x4, scoped, tag = 'scoped memory for ddqn_forward.1']
    #allocation6 [shape = 'u8[131072]{0}', space=vmem, size = 0x20000, scoped, tag = 'input window, operand 5, single buffered']
    %12 = vsyncpa [#allocation3], 0
    %13 = vsyncpa [#allocation5], 0
    // Predicated region
    $region2: #{ddqn_forward.1} parent=1 // pred_check
      _
    $region3: #{ddqn_forward.1} parent=1 // pred_check_branch
      %15 = sbr.rel (0) target = $region5
    $region4: #{ddqn_forward.1} parent=1 // pred_region
      _
    $region5: #{ddqn_forward.1} parent=1 // pred_fallthru
      _
    // Predicated region
    $region6: #{ddqn_forward.1} parent=1 // pred_check
      _
    $region7: #{ddqn_forward.1} parent=1 // pred_check_branch
      %17 = sbr.rel (0) target = $region9
    $region8: #{ddqn_forward.1} parent=1 // pred_region
      %19 = vsyncadd [#allocation3], 0
      %s20 = sshll.u32 %s1, 4
      %s21 = int_to_ptr.hbm [resolvable:$true] %s20
      %s22 = sshll.u32 [#allocation2], 4
      %s23 = int_to_ptr.vmem [resolvable:$true] %s22
      %28 = dma.hbm_to_vmem [thread:$0]  %s21, 2368, %s23, [#allocation3], 64, 64, 4
    $region9: #{ddqn_forward.1} parent=1 // pred_fallthru
      _
    // Predicated region
    $region10: #{ddqn_forward.1} parent=1 // pred_check
      _
    $region11: #{ddqn_forward.1} parent=1 // pred_check_branch
      %30 = sbr.rel (0) target = $region13
    $region12: #{ddqn_forward.1} parent=1 // pred_region
      _
    $region13: #{ddqn_forward.1} parent=1 // pred_fallthru
      _
    // Predicated region
    $region14: #{ddqn_forward.1} parent=1 // pred_check
      _
    $region15: #{ddqn_forward.1} parent=1 // pred_check_branch
      %32 = sbr.rel (0) target = $region17
    $region16: #{ddqn_forward.1} parent=1 // pred_region
      %34 = vsyncadd [#allocation5], 0
      %s35 = sshll.u32 %s3, 4
      %s36 = int_to_ptr.hbm [resolvable:$true] %s35
      %s37 = sshll.u32 [#allocation4], 4
      %s38 = int_to_ptr.vmem [resolvable:$true] %s37
      %43 = dma.hbm_to_vmem [thread:$0]  %s36, 4096, %s38, [#allocation5], 256, 256, 16
    $region17: #{ddqn_forward.1} parent=1 // pred_fallthru
      _
    // Predicated region
    $region18: #{ddqn_forward.1} parent=1 // pred_check
      _
    $region19: #{ddqn_forward.1} parent=1 // pred_check_branch
      %45 = sbr.rel (0) target = $region21
    $region20: #{ddqn_forward.1} parent=1 // pred_region
      _
    $region21: #{ddqn_forward.1} parent=1 // pred_fallthru
      _
    // Predicated region
    $region22: #{ddqn_forward.1} parent=1 // pred_check
      _
    $region23: #{ddqn_forward.1} parent=1 // pred_check_branch
      %47 = sbr.rel (0) target = $region25
    $region24: #{ddqn_forward.1} parent=1 // pred_region
      %49 = vsyncadd [#allocation5], 0
      %s50 = sshll.u32 %s5, 4
      %s51 = int_to_ptr.hbm [resolvable:$true] %s50
      %s52 = sshll.u32 [#allocation6], 4
      %s53 = int_to_ptr.vmem [resolvable:$true] %s52
      %58 = dma.hbm_to_vmem [thread:$0]  %s51, 4096, %s53, [#allocation5], 64, 64, 4
    $region25: #{ddqn_forward.1} parent=1 // pred_fallthru
      _
    // Predicated region
    $region26: #{ddqn_forward.1} parent=1 // pred_check
      _
    $region27: #{ddqn_forward.1} parent=1 // pred_check_branch
      %60 = sbr.rel (0) target = $region29
    $region28: #{ddqn_forward.1} parent=1 // pred_region
      _
    $region29: #{ddqn_forward.1} parent=1 // pred_fallthru
      _
    // Predicated region
    $region30: #{ddqn_forward.1} parent=1 // pred_check
      _
    $region31: #{ddqn_forward.1} parent=1 // pred_check_branch
      %62 = sbr.rel (0) target = $region33
    $region32: #{ddqn_forward.1} parent=1 // pred_region
      %64 = dma.done [#allocation3], 2368
    $region33: #{ddqn_forward.1} parent=1 // pred_fallthru
      _
    // Predicated region
    $region34: #{ddqn_forward.1} parent=1 // pred_check
      _
    $region35: #{ddqn_forward.1} parent=1 // pred_check_branch
      %66 = sbr.rel (0) target = $region37
    $region36: #{ddqn_forward.1} parent=1 // pred_region
      %68 = dma.done [#allocation5], 4096
    $region37: #{ddqn_forward.1} parent=1 // pred_fallthru
      _
    // Predicated region
    $region38: #{ddqn_forward.1} parent=1 // pred_check
      _
    $region39: #{ddqn_forward.1} parent=1 // pred_check_branch
      %70 = sbr.rel (0) target = $region41
    $region40: #{ddqn_forward.1} parent=1 // pred_region
      %72 = dma.done [#allocation5], 4096
    $region41: #{ddqn_forward.1} parent=1 // pred_fallthru
      _
    %v74 = vld [vmem:[%s0] sm:$0xff]
    %v75 = vld [vmem:[%s0 + $0x8] sm:$0xff]
    %v76 = vld [vmem:[%s0 + $0x10] sm:$0xff]
    %v77 = vpack.c.bf16 %v74, %v74
    %v78 = vpack.c.bf16 %v75, %v75
    %v79 = vpack.c.bf16 %v76, %v76
    %v80 = vld [vmem:[#allocation2] sm:$0xf]
    %v81 = vld [vmem:[#allocation2 + $0x4] sm:$0xf]
    %v82 = vld [vmem:[#allocation2 + $0x8] sm:$0xf]
    %v83 = vld [vmem:[#allocation2 + $0xc] sm:$0xf]
    %v84 = vld [vmem:[#allocation2 + $0x10] sm:$0xf]
    %v85 = vld [vmem:[#allocation2 + $0x14] sm:$0xf]
    %v86 = vld [vmem:[#allocation2 + $0x18] sm:$0xf]
    %v87 = vld [vmem:[#allocation2 + $0x1c] sm:$0xf]
    %v88 = vld [vmem:[#allocation2 + $0x20] sm:$0xf]
    %v89 = vld [vmem:[#allocation2 + $0x24] sm:$0xf]
    %v90 = vld [vmem:[#allocation2 + $0x28] sm:$0xf]
    %v91 = vld [vmem:[#allocation2 + $0x2c] sm:$0xf]
    %v92 = vld [vmem:[#allocation2 + $0x30] sm:$0xf]
    %v93 = vld [vmem:[#allocation2 + $0x34] sm:$0xf]
    %v94 = vld [vmem:[#allocation2 + $0x38] sm:$0xf]
    %v95 = vld [vmem:[#allocation2 + $0x3c] sm:$0xf]
    %v96 = vld [vmem:[#allocation2 + $0x40] sm:$0xf]
    %v97 = vld [vmem:[#allocation2 + $0x44] sm:$0xf]
    %v98 = vld [vmem:[#allocation2 + $0x48] sm:$0xf]
    %v99 = vld [vmem:[#allocation2 + $0x4c] sm:$0xf]
    %v100 = vld [vmem:[#allocation2 + $0x50] sm:$0xf]
    %v101 = vld [vmem:[#allocation2 + $0x54] sm:$0xf]
    %v102 = vld [vmem:[#allocation2 + $0x58] sm:$0xf]
    %v103 = vld [vmem:[#allocation2 + $0x5c] sm:$0xf]
    %v104 = vld [vmem:[#allocation2 + $0x60] sm:$0xf]
    %v105 = vld [vmem:[#allocation2 + $0x64] sm:$0xf]
    %v106 = vld [vmem:[#allocation2 + $0x68] sm:$0xf]
    %v107 = vld [vmem:[#allocation2 + $0x6c] sm:$0xf]
    %v108 = vld [vmem:[#allocation2 + $0x70] sm:$0xf]
    %v109 = vld [vmem:[#allocation2 + $0x74] sm:$0xf]
    %v110 = vld [vmem:[#allocation2 + $0x78] sm:$0xf]
    %v111 = vld [vmem:[#allocation2 + $0x7c] sm:$0xf]
    %v112 = vld [vmem:[#allocation2 + $0x80] sm:$0xf]
    %v113 = vld [vmem:[#allocation2 + $0x84] sm:$0xf]
    %v114 = vld [vmem:[#allocation2 + $0x88] sm:$0xf]
    %v115 = vld [vmem:[#allocation2 + $0x8c] sm:$0xf]
    %v116 = vld [vmem:[#allocation2 + $0x90] sm:$0x7]
    %v117 = vld [vmem:[%s2] sm:$0x1]
    %v119 = vperm.slane %v117, 0
    %v158 = vunpack.c.l.b16 %v80
    %v159 = vunpack.c.l.b16 %v81
    %v160 = vunpack.c.l.b16 %v82
    %v161 = vunpack.c.l.b16 %v83
    %v162 = vunpack.c.l.b16 %v84
    %v163 = vunpack.c.l.b16 %v85
    %v164 = vunpack.c.l.b16 %v86
    %v165 = vunpack.c.l.b16 %v87
    %v166 = vunpack.c.l.b16 %v88
    %v167 = vunpack.c.l.b16 %v89
    %v168 = vunpack.c.l.b16 %v90
    %v169 = vunpack.c.l.b16 %v91
    %v170 = vunpack.c.l.b16 %v92
    %v171 = vunpack.c.l.b16 %v93
    %v172 = vunpack.c.l.b16 %v94
    %v173 = vunpack.c.l.b16 %v95
    %v174 = vunpack.c.l.b16 %v96
    %v175 = vunpack.c.l.b16 %v97
    %v176 = vunpack.c.l.b16 %v98
    %v177 = vunpack.c.l.b16 %v99
    %v178 = vunpack.c.l.b16 %v100
    %v179 = vunpack.c.l.b16 %v101
    %v180 = vunpack.c.l.b16 %v102
    %v181 = vunpack.c.l.b16 %v103
    %v182 = vunpack.c.l.b16 %v104
    %v183 = vunpack.c.l.b16 %v105
    %v184 = vunpack.c.l.b16 %v106
    %v185 = vunpack.c.l.b16 %v107
    %v186 = vunpack.c.l.b16 %v108
    %v187 = vunpack.c.l.b16 %v109
    %v188 = vunpack.c.l.b16 %v110
    %v189 = vunpack.c.l.b16 %v111
    %v190 = vunpack.c.l.b16 %v112
    %v191 = vunpack.c.l.b16 %v113
    %v192 = vunpack.c.l.b16 %v114
    %v193 = vunpack.c.l.b16 %v115
    %v194 = vunpack.c.l.b16 %v116
    %v195 = vpack.c.b16 %v159, %v158
    %v196 = vpack.c.b16 %v161, %v160
    %v197 = vpack.c.b16 %v163, %v162
    %v198 = vpack.c.b16 %v165, %v164
    %v199 = vpack.c.b16 %v167, %v166
    %v200 = vpack.c.b16 %v169, %v168
    %v201 = vpack.c.b16 %v171, %v170
    %v202 = vpack.c.b16 %v173, %v172
    %v203 = vpack.c.b16 %v175, %v174
    %v204 = vpack.c.b16 %v177, %v176
    %v205 = vpack.c.b16 %v179, %v178
    %v206 = vpack.c.b16 %v181, %v180
    %v207 = vpack.c.b16 %v183, %v182
    %v208 = vpack.c.b16 %v185, %v184
    %v209 = vpack.c.b16 %v187, %v186
    %v210 = vpack.c.b16 %v189, %v188
    %v211 = vpack.c.b16 %v191, %v190
    %v212 = vpack.c.b16 %v193, %v192
    %v213 = vpack.c.b16 %v194, %v194
    %vm232 = vcmask 310272
    %v234 = vsel %vm232, %v79, 0
    %vm236 = vcmask 1042432
    %v238 = vsel %vm236, %v213, 0
    %240 = vmatpush.bf16.msra.mxu0 %v202
    %241 = vmatpush.bf16.msra.mxu0 %v201
    %242 = vmatpush.bf16.msra.mxu0 %v200
    %243 = vmatpush.bf16.msra.mxu0 %v199
    %244 = vmatpush.bf16.msra.mxu0 %v198
    %245 = vmatpush.bf16.msra.mxu0 %v197
    %246 = vmatpush.bf16.msra.mxu0 %v196
    %247 = vmatpush.bf16.msra.mxu0 %v195
    %248 = vmatmul.bf16.gmra.mxu0 %v77
    %v249 = vpop.f32.mrf.mxu0
    %v250 = vadd.f32 %v119, %v249
    %v251 = vpop.f32.mrf.mxu0
    %252 = vdwg.mxu0
    %253 = vmatpush.bf16.msra.mxu0 %v210
    %254 = vmatpush.bf16.msra.mxu0 %v209
    %255 = vmatpush.bf16.msra.mxu0 %v208
    %256 = vmatpush.bf16.msra.mxu0 %v207
    %257 = vmatpush.bf16.msra.mxu0 %v206
    %258 = vmatpush.bf16.msra.mxu0 %v205
    %259 = vmatpush.bf16.msra.mxu0 %v204
    %260 = vmatpush.bf16.msra.mxu0 %v203
    %261 = vmatmul.bf16.gmra.mxu0 %v78
    %v262 = vpop.f32.mrf.mxu0
    %v263 = vadd.f32 %v250, %v262
    %v264 = vpop.f32.mrf.mxu0
    %265 = vdwg.mxu0
    %266 = vmatpush.bf16.msra.mxu0 0
    %267 = vmatpush.bf16.msra.mxu0 0
    %268 = vmatpush.bf16.msra.mxu0 0
    %269 = vmatpush.bf16.msra.mxu0 0
    %270 = vmatpush.bf16.msra.mxu0 0
    %271 = vmatpush.bf16.msra.mxu0 %v238
    %272 = vmatpush.bf16.msra.mxu0 %v212
    %273 = vmatpush.bf16.msra.mxu0 %v211
    %274 = vmatmul.bf16.gmra.mxu0 %v234
    %v275 = vpop.f32.mrf.mxu0
    %v276 = vadd.f32 %v263, %v275
    %v277 = vpop.f32.mrf.mxu0
    %278 = vdwg.mxu0
    %v279 = vmax.f32 %v276, 0.0
    %v280 = vpack.c.bf16 %v279, %v279
    %v281 = vld [vmem:[#allocation4] sm:$0xff]
    %v282 = vld [vmem:[#allocation4 + $0x8] sm:$0xff]
    %v283 = vld [vmem:[#allocation4 + $0x10] sm:$0xff]
    %v284 = vld [vmem:[#allocation4 + $0x18] sm:$0xff]
    %v285 = vld [vmem:[#allocation4 + $0x20] sm:$0xff]
    %v286 = vld [vmem:[#allocation4 + $0x28] sm:$0xff]
    %v287 = vld [vmem:[#allocation4 + $0x30] sm:$0xff]
    %v288 = vld [vmem:[#allocation4 + $0x38] sm:$0xff]
    %v289 = vld [vmem:[#allocation4 + $0x40] sm:$0xff]
    %v290 = vld [vmem:[#allocation4 + $0x48] sm:$0xff]
    %v291 = vld [vmem:[#allocation4 + $0x50] sm:$0xff]
    %v292 = vld [vmem:[#allocation4 + $0x58] sm:$0xff]
    %v293 = vld [vmem:[#allocation4 + $0x60] sm:$0xff]
    %v294 = vld [vmem:[#allocation4 + $0x68] sm:$0xff]
    %v295 = vld [vmem:[#allocation4 + $0x70] sm:$0xff]
    %v296 = vld [vmem:[#allocation4 + $0x78] sm:$0xff]
    %v297 = vld [vmem:[#allocation4 + $0x80] sm:$0xff]
    %v298 = vld [vmem:[#allocation4 + $0x88] sm:$0xff]
    %v299 = vld [vmem:[#allocation4 + $0x90] sm:$0xff]
    %v300 = vld [vmem:[#allocation4 + $0x98] sm:$0xff]
    %v301 = vld [vmem:[#allocation4 + $0xa0] sm:$0xff]
    %v302 = vld [vmem:[#allocation4 + $0xa8] sm:$0xff]
    %v303 = vld [vmem:[#allocation4 + $0xb0] sm:$0xff]
    %v304 = vld [vmem:[#allocation4 + $0xb8] sm:$0xff]
    %v305 = vld [vmem:[#allocation4 + $0xc0] sm:$0xff]
    %v306 = vld [vmem:[#allocation4 + $0xc8] sm:$0xff]
    %v307 = vld [vmem:[#allocation4 + $0xd0] sm:$0xff]
    %v308 = vld [vmem:[#allocation4 + $0xd8] sm:$0xff]
    %v309 = vld [vmem:[#allocation4 + $0xe0] sm:$0xff]
    %v310 = vld [vmem:[#allocation4 + $0xe8] sm:$0xff]
    %v311 = vld [vmem:[#allocation4 + $0xf0] sm:$0xff]
    %v312 = vld [vmem:[#allocation4 + $0xf8] sm:$0xff]
    %v345 = vunpack.c.l.b16 %v281
    %v346 = vunpack.c.h.b16 %v281
    %v347 = vunpack.c.l.b16 %v282
    %v348 = vunpack.c.h.b16 %v282
    %v349 = vunpack.c.l.b16 %v283
    %v350 = vunpack.c.h.b16 %v283
    %v351 = vunpack.c.l.b16 %v284
    %v352 = vunpack.c.h.b16 %v284
    %v353 = vunpack.c.l.b16 %v285
    %v354 = vunpack.c.h.b16 %v285
    %v355 = vunpack.c.l.b16 %v286
    %v356 = vunpack.c.h.b16 %v286
    %v357 = vunpack.c.l.b16 %v287
    %v358 = vunpack.c.h.b16 %v287
    %v359 = vunpack.c.l.b16 %v288
    %v360 = vunpack.c.h.b16 %v288
    %v361 = vunpack.c.l.b16 %v289
    %v362 = vunpack.c.h.b16 %v289
    %v363 = vunpack.c.l.b16 %v290
    %v364 = vunpack.c.h.b16 %v290
    %v365 = vunpack.c.l.b16 %v291
    %v366 = vunpack.c.h.b16 %v291
    %v367 = vunpack.c.l.b16 %v292
    %v368 = vunpack.c.h.b16 %v292
    %v369 = vunpack.c.l.b16 %v293
    %v370 = vunpack.c.h.b16 %v293
    %v371 = vunpack.c.l.b16 %v294
    %v372 = vunpack.c.h.b16 %v294
    %v373 = vunpack.c.l.b16 %v295
    %v374 = vunpack.c.h.b16 %v295
    %v375 = vunpack.c.l.b16 %v296
    %v376 = vunpack.c.h.b16 %v296
    %v377 = vunpack.c.l.b16 %v297
    %v378 = vunpack.c.h.b16 %v297
    %v379 = vunpack.c.l.b16 %v298
    %v380 = vunpack.c.h.b16 %v298
    %v381 = vunpack.c.l.b16 %v299
    %v382 = vunpack.c.h.b16 %v299
    %v383 = vunpack.c.l.b16 %v300
    %v384 = vunpack.c.h.b16 %v300
    %v385 = vunpack.c.l.b16 %v301
    %v386 = vunpack.c.h.b16 %v301
    %v387 = vunpack.c.l.b16 %v302
    %v388 = vunpack.c.h.b16 %v302
    %v389 = vunpack.c.l.b16 %v303
    %v390 = vunpack.c.h.b16 %v303
    %v391 = vunpack.c.l.b16 %v304
    %v392 = vunpack.c.h.b16 %v304
    %v393 = vunpack.c.l.b16 %v305
    %v394 = vunpack.c.h.b16 %v305
    %v395 = vunpack.c.l.b16 %v306
    %v396 = vunpack.c.h.b16 %v306
    %v397 = vunpack.c.l.b16 %v307
    %v398 = vunpack.c.h.b16 %v307
    %v399 = vunpack.c.l.b16 %v308
    %v400 = vunpack.c.h.b16 %v308
    %v401 = vunpack.c.l.b16 %v309
    %v402 = vunpack.c.h.b16 %v309
    %v403 = vunpack.c.l.b16 %v310
    %v404 = vunpack.c.h.b16 %v310
    %v405 = vunpack.c.l.b16 %v311
    %v406 = vunpack.c.h.b16 %v311
    %v407 = vunpack.c.l.b16 %v312
    %v408 = vunpack.c.h.b16 %v312
    %v409 = vpack.c.b16 %v349, %v345
    %v410 = vpack.c.b16 %v350, %v346
    %v411 = vpack.c.b16 %v351, %v347
    %v412 = vpack.c.b16 %v352, %v348
    %v413 = vpack.c.b16 %v357, %v353
    %v414 = vpack.c.b16 %v358, %v354
    %v415 = vpack.c.b16 %v359, %v355
    %v416 = vpack.c.b16 %v360, %v356
    %v417 = vpack.c.b16 %v365, %v361
    %v418 = vpack.c.b16 %v366, %v362
    %v419 = vpack.c.b16 %v367, %v363
    %v420 = vpack.c.b16 %v368, %v364
    %v421 = vpack.c.b16 %v373, %v369
    %v422 = vpack.c.b16 %v374, %v370
    %v423 = vpack.c.b16 %v375, %v371
    %v424 = vpack.c.b16 %v376, %v372
    %v425 = vpack.c.b16 %v381, %v377
    %v426 = vpack.c.b16 %v382, %v378
    %v427 = vpack.c.b16 %v383, %v379
    %v428 = vpack.c.b16 %v384, %v380
    %v429 = vpack.c.b16 %v389, %v385
    %v430 = vpack.c.b16 %v390, %v386
    %v431 = vpack.c.b16 %v391, %v387
    %v432 = vpack.c.b16 %v392, %v388
    %v433 = vpack.c.b16 %v397, %v393
    %v434 = vpack.c.b16 %v398, %v394
    %v435 = vpack.c.b16 %v399, %v395
    %v436 = vpack.c.b16 %v400, %v396
    %v437 = vpack.c.b16 %v405, %v401
    %v438 = vpack.c.b16 %v406, %v402
    %v439 = vpack.c.b16 %v407, %v403
    %v440 = vpack.c.b16 %v408, %v404
    %473 = vmatpush.bf16.msra.mxu0 %v437
    %474 = vmatpush.bf16.msra.mxu0 %v433
    %475 = vmatpush.bf16.msra.mxu0 %v429
    %476 = vmatpush.bf16.msra.mxu0 %v425
    %477 = vmatpush.bf16.msra.mxu0 %v421
    %478 = vmatpush.bf16.msra.mxu0 %v417
    %479 = vmatpush.bf16.msra.mxu0 %v413
    %480 = vmatpush.bf16.msra.mxu0 %v409
    %481 = vmatmul.bf16.gmra.mxu0 %v280
    %v482 = vpop.f32.mrf.mxu0
    %v483 = vadd.f32 0.0, %v482
    %v484 = vpop.f32.mrf.mxu0
    %485 = vdwg.mxu0
    %486 = vmatpush.bf16.msra.mxu0 %v438
    %487 = vmatpush.bf16.msra.mxu0 %v434
    %488 = vmatpush.bf16.msra.mxu0 %v430
    %489 = vmatpush.bf16.msra.mxu0 %v426
    %490 = vmatpush.bf16.msra.mxu0 %v422
    %491 = vmatpush.bf16.msra.mxu0 %v418
    %492 = vmatpush.bf16.msra.mxu0 %v414
    %493 = vmatpush.bf16.msra.mxu0 %v410
    %494 = vmatmul.bf16.gmra.mxu0 %v280
    %v495 = vpop.f32.mrf.mxu0
    %v496 = vadd.f32 0.0, %v495
    %v497 = vpop.f32.mrf.mxu0
    %498 = vdwg.mxu0
    %499 = vmatpush.bf16.msra.mxu0 %v439
    %500 = vmatpush.bf16.msra.mxu0 %v435
    %501 = vmatpush.bf16.msra.mxu0 %v431
    %502 = vmatpush.bf16.msra.mxu0 %v427
    %503 = vmatpush.bf16.msra.mxu0 %v423
    %504 = vmatpush.bf16.msra.mxu0 %v419
    %505 = vmatpush.bf16.msra.mxu0 %v415
    %506 = vmatpush.bf16.msra.mxu0 %v411
    %507 = vmatmul.bf16.gmra.mxu0 %v280
    %v508 = vpop.f32.mrf.mxu0
    %v509 = vadd.f32 0.0, %v508
    %v510 = vpop.f32.mrf.mxu0
    %511 = vdwg.mxu0
    %512 = vmatpush.bf16.msra.mxu0 %v440
    %513 = vmatpush.bf16.msra.mxu0 %v436
    %514 = vmatpush.bf16.msra.mxu0 %v432
    %515 = vmatpush.bf16.msra.mxu0 %v428
    %516 = vmatpush.bf16.msra.mxu0 %v424
    %517 = vmatpush.bf16.msra.mxu0 %v420
    %518 = vmatpush.bf16.msra.mxu0 %v416
    %519 = vmatpush.bf16.msra.mxu0 %v412
    %520 = vmatmul.bf16.gmra.mxu0 %v280
    %v521 = vpop.f32.mrf.mxu0
    %v522 = vadd.f32 0.0, %v521
    %v523 = vpop.f32.mrf.mxu0
    %524 = vdwg.mxu0
    %v525 = vpack.c.bf16 %v496, %v483
    %v526 = vpack.c.bf16 %v522, %v509
    %v527 = vld [vmem:[%s4] sm:$0xf]
    %529 = vst [vmem:[#allocation1] ss:$9 sm:$0xff] %v527
    %v530 = vld [vmem:[#allocation1] sm:$0xff]
    %v531 = vld [vmem:[#allocation1 + $0x9] sm:$0xff]
    %v532 = vld [vmem:[#allocation1 + $0x12] sm:$0xff]
    %v533 = vld [vmem:[#allocation1 + $0x1b] sm:$0xff]
    %v534 = vpack.i.b16 %v530, %v530
    %v536 = vperm.slane %v534, 0
    %v537 = vpack.i.b16 %v531, %v531
    %v539 = vperm.slane %v537, 0
    %v540 = vpack.i.b16 %v532, %v532
    %v542 = vperm.slane %v540, 0
    %v543 = vpack.i.b16 %v533, %v533
    %v545 = vperm.slane %v543, 0
    %v546 = vunpack.c.l.bf16 %v525
    %v547 = vunpack.c.h.bf16 %v525
    %v548 = vunpack.c.l.bf16 %v526
    %v549 = vunpack.c.h.bf16 %v526
    %v550 = vunpack.c.l.bf16 %v536
    %v551 = vunpack.c.l.bf16 %v539
    %v552 = vunpack.c.l.bf16 %v542
    %v553 = vunpack.c.l.bf16 %v545
    %v554 = vadd.f32 %v546, %v550
    %v555 = vadd.f32 %v547, %v551
    %v556 = vadd.f32 %v548, %v552
    %v557 = vadd.f32 %v549, %v553
    %v558 = vpack.c.bf16 %v555, %v554
    %v559 = vpack.c.bf16 %v557, %v556
    %v560 = vunpack.c.l.bf16 %v558
    %v561 = vunpack.c.h.bf16 %v558
    %v562 = vunpack.c.l.bf16 %v559
    %v563 = vunpack.c.h.bf16 %v559
    %v564 = vmax.f32 %v560, 0.0
    %v565 = vmax.f32 %v561, 0.0
    %v566 = vmax.f32 %v562, 0.0
    %v567 = vmax.f32 %v563, 0.0
    %v568 = vpack.c.bf16 %v564, %v564
    %v569 = vpack.c.bf16 %v565, %v565
    %v570 = vpack.c.bf16 %v566, %v566
    %v571 = vpack.c.bf16 %v567, %v567
    %v572 = vld [vmem:[#allocation6] sm:$0xf]
    %v573 = vld [vmem:[#allocation6 + $0x4] sm:$0xf]
    %v574 = vld [vmem:[#allocation6 + $0x8] sm:$0xf]
    %v575 = vld [vmem:[#allocation6 + $0xc] sm:$0xf]
    %v576 = vld [vmem:[#allocation6 + $0x10] sm:$0xf]
    %v577 = vld [vmem:[#allocation6 + $0x14] sm:$0xf]
    %v578 = vld [vmem:[#allocation6 + $0x18] sm:$0xf]
    %v579 = vld [vmem:[#allocation6 + $0x1c] sm:$0xf]
    %v580 = vld [vmem:[#allocation6 + $0x20] sm:$0xf]
    %v581 = vld [vmem:[#allocation6 + $0x24] sm:$0xf]
    %v582 = vld [vmem:[#allocation6 + $0x28] sm:$0xf]
    %v583 = vld [vmem:[#allocation6 + $0x2c] sm:$0xf]
    %v584 = vld [vmem:[#allocation6 + $0x30] sm:$0xf]
    %v585 = vld [vmem:[#allocation6 + $0x34] sm:$0xf]
    %v586 = vld [vmem:[#allocation6 + $0x38] sm:$0xf]
    %v587 = vld [vmem:[#allocation6 + $0x3c] sm:$0xf]
    %v588 = vld [vmem:[#allocation6 + $0x40] sm:$0xf]
    %v589 = vld [vmem:[#allocation6 + $0x44] sm:$0xf]
    %v590 = vld [vmem:[#allocation6 + $0x48] sm:$0xf]
    %v591 = vld [vmem:[#allocation6 + $0x4c] sm:$0xf]
    %v592 = vld [vmem:[#allocation6 + $0x50] sm:$0xf]
    %v593 = vld [vmem:[#allocation6 + $0x54] sm:$0xf]
    %v594 = vld [vmem:[#allocation6 + $0x58] sm:$0xf]
    %v595 = vld [vmem:[#allocation6 + $0x5c] sm:$0xf]
    %v596 = vld [vmem:[#allocation6 + $0x60] sm:$0xf]
    %v597 = vld [vmem:[#allocation6 + $0x64] sm:$0xf]
    %v598 = vld [vmem:[#allocation6 + $0x68] sm:$0xf]
    %v599 = vld [vmem:[#allocation6 + $0x6c] sm:$0xf]
    %v600 = vld [vmem:[#allocation6 + $0x70] sm:$0xf]
    %v601 = vld [vmem:[#allocation6 + $0x74] sm:$0xf]
    %v602 = vld [vmem:[#allocation6 + $0x78] sm:$0xf]
    %v603 = vld [vmem:[#allocation6 + $0x7c] sm:$0xf]
    %v604 = vld [vmem:[#allocation6 + $0x80] sm:$0xf]
    %v605 = vld [vmem:[#allocation6 + $0x84] sm:$0xf]
    %v606 = vld [vmem:[#allocation6 + $0x88] sm:$0xf]
    %v607 = vld [vmem:[#allocation6 + $0x8c] sm:$0xf]
    %v608 = vld [vmem:[#allocation6 + $0x90] sm:$0xf]
    %v609 = vld [vmem:[#allocation6 + $0x94] sm:$0xf]
    %v610 = vld [vmem:[#allocation6 + $0x98] sm:$0xf]
    %v611 = vld [vmem:[#allocation6 + $0x9c] sm:$0xf]
    %v612 = vld [vmem:[#allocation6 + $0xa0] sm:$0xf]
    %v613 = vld [vmem:[#allocation6 + $0xa4] sm:$0xf]
    %v614 = vld [vmem:[#allocation6 + $0xa8] sm:$0xf]
    %v615 = vld [vmem:[#allocation6 + $0xac] sm:$0xf]
    %v616 = vld [vmem:[#allocation6 + $0xb0] sm:$0xf]
    %v617 = vld [vmem:[#allocation6 + $0xb4] sm:$0xf]
    %v618 = vld [vmem:[#allocation6 + $0xb8] sm:$0xf]
    %v619 = vld [vmem:[#allocation6 + $0xbc] sm:$0xf]
    %v620 = vld [vmem:[#allocation6 + $0xc0] sm:$0xf]
    %v621 = vld [vmem:[#allocation6 + $0xc4] sm:$0xf]
    %v622 = vld [vmem:[#allocation6 + $0xc8] sm:$0xf]
    %v623 = vld [vmem:[#allocation6 + $0xcc] sm:$0xf]
    %v624 = vld [vmem:[#allocation6 + $0xd0] sm:$0xf]
    %v625 = vld [vmem:[#allocation6 + $0xd4] sm:$0xf]
    %v626 = vld [vmem:[#allocation6 + $0xd8] sm:$0xf]
    %v627 = vld [vmem:[#allocation6 + $0xdc] sm:$0xf]
    %v628 = vld [vmem:[#allocation6 + $0xe0] sm:$0xf]
    %v629 = vld [vmem:[#allocation6 + $0xe4] sm:$0xf]
    %v630 = vld [vmem:[#allocation6 + $0xe8] sm:$0xf]
    %v631 = vld [vmem:[#allocation6 + $0xec] sm:$0xf]
    %v632 = vld [vmem:[#allocation6 + $0xf0] sm:$0xf]
    %v633 = vld [vmem:[#allocation6 + $0xf4] sm:$0xf]
    %v634 = vld [vmem:[#allocation6 + $0xf8] sm:$0xf]
    %v635 = vld [vmem:[#allocation6 + $0xfc] sm:$0xf]
    %v636 = vld [vmem:[%s6] sm:$0x1]
    %v638 = vperm.slane %v636, 0
    %v704 = vunpack.c.l.b16 %v572
    %v705 = vunpack.c.l.b16 %v573
    %v706 = vunpack.c.l.b16 %v574
    %v707 = vunpack.c.l.b16 %v575
    %v708 = vunpack.c.l.b16 %v576
    %v709 = vunpack.c.l.b16 %v577
    %v710 = vunpack.c.l.b16 %v578
    %v711 = vunpack.c.l.b16 %v579
    %v712 = vunpack.c.l.b16 %v580
    %v713 = vunpack.c.l.b16 %v581
    %v714 = vunpack.c.l.b16 %v582
    %v715 = vunpack.c.l.b16 %v583
    %v716 = vunpack.c.l.b16 %v584
    %v717 = vunpack.c.l.b16 %v585
    %v718 = vunpack.c.l.b16 %v586
    %v719 = vunpack.c.l.b16 %v587
    %v720 = vunpack.c.l.b16 %v588
    %v721 = vunpack.c.l.b16 %v589
    %v722 = vunpack.c.l.b16 %v590
    %v723 = vunpack.c.l.b16 %v591
    %v724 = vunpack.c.l.b16 %v592
    %v725 = vunpack.c.l.b16 %v593
    %v726 = vunpack.c.l.b16 %v594
    %v727 = vunpack.c.l.b16 %v595
    %v728 = vunpack.c.l.b16 %v596
    %v729 = vunpack.c.l.b16 %v597
    %v730 = vunpack.c.l.b16 %v598
    %v731 = vunpack.c.l.b16 %v599
    %v732 = vunpack.c.l.b16 %v600
    %v733 = vunpack.c.l.b16 %v601
    %v734 = vunpack.c.l.b16 %v602
    %v735 = vunpack.c.l.b16 %v603
    %v736 = vunpack.c.l.b16 %v604
    %v737 = vunpack.c.l.b16 %v605
    %v738 = vunpack.c.l.b16 %v606
    %v739 = vunpack.c.l.b16 %v607
    %v740 = vunpack.c.l.b16 %v608
    %v741 = vunpack.c.l.b16 %v609
    %v742 = vunpack.c.l.b16 %v610
    %v743 = vunpack.c.l.b16 %v611
    %v744 = vunpack.c.l.b16 %v612
    %v745 = vunpack.c.l.b16 %v613
    %v746 = vunpack.c.l.b16 %v614
    %v747 = vunpack.c.l.b16 %v615
    %v748 = vunpack.c.l.b16 %v616
    %v749 = vunpack.c.l.b16 %v617
    %v750 = vunpack.c.l.b16 %v618
    %v751 = vunpack.c.l.b16 %v619
    %v752 = vunpack.c.l.b16 %v620
    %v753 = vunpack.c.l.b16 %v621
    %v754 = vunpack.c.l.b16 %v622
    %v755 = vunpack.c.l.b16 %v623
    %v756 = vunpack.c.l.b16 %v624
    %v757 = vunpack.c.l.b16 %v625
    %v758 = vunpack.c.l.b16 %v626
    %v759 = vunpack.c.l.b16 %v627
    %v760 = vunpack.c.l.b16 %v628
    %v761 = vunpack.c.l.b16 %v629
    %v762 = vunpack.c.l.b16 %v630
    %v763 = vunpack.c.l.b16 %v631
    %v764 = vunpack.c.l.b16 %v632
    %v765 = vunpack.c.l.b16 %v633
    %v766 = vunpack.c.l.b16 %v634
    %v767 = vunpack.c.l.b16 %v635
    %v768 = vpack.c.b16 %v705, %v704
    %v769 = vpack.c.b16 %v707, %v706
    %v770 = vpack.c.b16 %v709, %v708
    %v771 = vpack.c.b16 %v711, %v710
    %v772 = vpack.c.b16 %v713, %v712
    %v773 = vpack.c.b16 %v715, %v714
    %v774 = vpack.c.b16 %v717, %v716
    %v775 = vpack.c.b16 %v719, %v718
    %v776 = vpack.c.b16 %v721, %v720
    %v777 = vpack.c.b16 %v723, %v722
    %v778 = vpack.c.b16 %v725, %v724
    %v779 = vpack.c.b16 %v727, %v726
    %v780 = vpack.c.b16 %v729, %v728
    %v781 = vpack.c.b16 %v731, %v730
    %v782 = vpack.c.b16 %v733, %v732
    %v783 = vpack.c.b16 %v735, %v734
    %v784 = vpack.c.b16 %v737, %v736
    %v785 = vpack.c.b16 %v739, %v738
    %v786 = vpack.c.b16 %v741, %v740
    %v787 = vpack.c.b16 %v743, %v742
    %v788 = vpack.c.b16 %v745, %v744
    %v789 = vpack.c.b16 %v747, %v746
    %v790 = vpack.c.b16 %v749, %v748
    %v791 = vpack.c.b16 %v751, %v750
    %v792 = vpack.c.b16 %v753, %v752
    %v793 = vpack.c.b16 %v755, %v754
    %v794 = vpack.c.b16 %v757, %v756
    %v795 = vpack.c.b16 %v759, %v758
    %v796 = vpack.c.b16 %v761, %v760
    %v797 = vpack.c.b16 %v763, %v762
    %v798 = vpack.c.b16 %v765, %v764
    %v799 = vpack.c.b16 %v767, %v766
    %832 = vmatpush.bf16.msra.mxu0 %v775
    %833 = vmatpush.bf16.msra.mxu0 %v774
    %834 = vmatpush.bf16.msra.mxu0 %v773
    %835 = vmatpush.bf16.msra.mxu0 %v772
    %836 = vmatpush.bf16.msra.mxu0 %v771
    %837 = vmatpush.bf16.msra.mxu0 %v770
    %838 = vmatpush.bf16.msra.mxu0 %v769
    %839 = vmatpush.bf16.msra.mxu0 %v768
    %840 = vmatmul.bf16.gmra.mxu0 %v568
    %v841 = vpop.f32.mrf.mxu0
    %v842 = vadd.f32 %v638, %v841
    %v843 = vpop.f32.mrf.mxu0
    %844 = vdwg.mxu0
    %845 = vmatpush.bf16.msra.mxu0 %v783
    %846 = vmatpush.bf16.msra.mxu0 %v782
    %847 = vmatpush.bf16.msra.mxu0 %v781
    %848 = vmatpush.bf16.msra.mxu0 %v780
    %849 = vmatpush.bf16.msra.mxu0 %v779
    %850 = vmatpush.bf16.msra.mxu0 %v778
    %851 = vmatpush.bf16.msra.mxu0 %v777
    %852 = vmatpush.bf16.msra.mxu0 %v776
    %853 = vmatmul.bf16.gmra.mxu0 %v569
    %v854 = vpop.f32.mrf.mxu0
    %v855 = vadd.f32 %v842, %v854
    %v856 = vpop.f32.mrf.mxu0
    %857 = vdwg.mxu0
    %858 = vmatpush.bf16.msra.mxu0 %v791
    %859 = vmatpush.bf16.msra.mxu0 %v790
    %860 = vmatpush.bf16.msra.mxu0 %v789
    %861 = vmatpush.bf16.msra.mxu0 %v788
    %862 = vmatpush.bf16.msra.mxu0 %v787
    %863 = vmatpush.bf16.msra.mxu0 %v786
    %864 = vmatpush.bf16.msra.mxu0 %v785
    %865 = vmatpush.bf16.msra.mxu0 %v784
    %866 = vmatmul.bf16.gmra.mxu0 %v570
    %v867 = vpop.f32.mrf.mxu0
    %v868 = vadd.f32 %v855, %v867
    %v869 = vpop.f32.mrf.mxu0
    %870 = vdwg.mxu0
    %871 = vmatpush.bf16.msra.mxu0 %v799
    %872 = vmatpush.bf16.msra.mxu0 %v798
    %873 = vmatpush.bf16.msra.mxu0 %v797
    %874 = vmatpush.bf16.msra.mxu0 %v796
    %875 = vmatpush.bf16.msra.mxu0 %v795
    %876 = vmatpush.bf16.msra.mxu0 %v794
    %877 = vmatpush.bf16.msra.mxu0 %v793
    %878 = vmatpush.bf16.msra.mxu0 %v792
    %879 = vmatmul.bf16.gmra.mxu0 %v571
    %v880 = vpop.f32.mrf.mxu0
    %v881 = vadd.f32 %v868, %v880
    %v882 = vpop.f32.mrf.mxu0
    %883 = vdwg.mxu0
    %884 = vadd.xlane.f32.xlu0 %v881
    %v885 = vpop.xlane.xlu0 %884
    %v886 = vsub.f32 %v885, %v881
    %v887 = vmul.f32 %v886, 0.025641026
    %889 = vset.pattern.permute.xlu0 127
    %890 = vperm.xlu0 %889, %v881
    %v891 = vpop.permute.xlu0 %890
    %v893 = vadd.f32 %v891, %v881
    %895 = vset.pattern.permute.xlu0 127
    %896 = vperm.xlu0 %895, %v887
    %v897 = vpop.permute.xlu0 %896
    %v899 = vsub.f32 %v893, %v897
    %900 = vst [vmem:[%s7] sm:$0xff] %v899
    // Predicated region
    $region42: #{ddqn_forward.1} parent=1 // pred_check
      _
    $region43: #{ddqn_forward.1} parent=1 // pred_check_branch
      %902 = sbr.rel (0) target = $region45
    $region44: #{ddqn_forward.1} parent=1 // pred_region
      _
    $region45: #{ddqn_forward.1} parent=1 // pred_fallthru
      _
    // Predicated region
    $region46: #{ddqn_forward.1} parent=1 // pred_check
      _
    $region47: #{ddqn_forward.1} parent=1 // pred_check_branch
      %904 = sbr.rel (0) target = $region49
    $region48: #{ddqn_forward.1} parent=1 // pred_region
      _
    $region49: #{ddqn_forward.1} parent=1 // pred_fallthru
      _
    %905 = vsyncpa [#allocation3], 1
    %906 = vsyncpa [#allocation5], 1

</llo_original>
